<compile_context>
chip_gen: v6e
topology: v6e:2x2x1
jax: 0.10.0
libtpu: 0.0.40
codegen_flags: <defaults>
</compile_context>

<pallas_src>
import jax
import jax.numpy as jnp
from jax.experimental import pallas as pl
from jax.experimental.pallas import tpu as pltpu  # noqa: F401  (kept for TPU-specific tuning hooks)

# Synthetic environment constants (CartPole-like): obs dim 4, 2 actions.
N_STATES = 4
N_ACTIONS = 2
HIDDEN = 10
BATCH = 32          # learn-step replay batch; multiple of 8 (f32 sublane)

LANES = 128         # lane width of the vreg / output slab
B1_ROW = N_STATES   # slab row holding b1
B2_ROW = N_STATES + 1           # slab row holding b2
W2_ROW_OFF = 8      # slab row where the (padded) second-layer weights start
K2 = 16             # contraction depth of the second dot (HIDDEN padded to 16)
SLAB_ROWS = W2_ROW_OFF + K2     # 24 rows total -> 12 KiB slab

# Parameter-slab layout (f32[24, 128]):
#   rows 0..3   : W1 (N_STATES x HIDDEN), zero-padded to 128 lanes
#   row  4      : b1 (HIDDEN lanes, rest zero)
#   row  5      : b2 (N_ACTIONS lanes, rest zero)
#   rows 6..7   : zero padding (keeps the W2 block 8-row aligned)
#   rows 8..17  : W2 (HIDDEN x N_ACTIONS), zero-padded to 128 lanes
#   rows 18..23 : zero padding (pads K2 to 16; matching h lanes are 0)


def _mlp(x, p_ref):
    """relu(x @ W1 + b1) @ W2 + b2, reading parameters from one slab ref."""
    w1 = p_ref[0:N_STATES, :]                    # [N_STATES, 128]
    b1 = p_ref[B1_ROW:B1_ROW + 1, :]             # [1, 128]
    b2 = p_ref[B2_ROW:B2_ROW + 1, :]             # [1, 128]
    w2 = p_ref[W2_ROW_OFF:W2_ROW_OFF + K2, :]    # [K2, 128]

    h = jnp.dot(x, w1, preferred_element_type=jnp.float32) + b1
    h = jnp.maximum(h, 0.0)                      # [B, 128]; lanes >= HIDDEN are 0
    # K=16 contraction; the h[:, :16] lane slice stays within one (8,128) tile.
    y = jnp.dot(h[:, :K2], w2, preferred_element_type=jnp.float32) + b2
    return y                                     # [B, 128] lane-dense


def _net_kernel(x_ref, p_ref, o_ref):
    """Single fused MLP forward (the `Net.forward` of the spec)."""
    o_ref[...] = _mlp(x_ref[...], p_ref).astype(o_ref.dtype)


def _dqn_pair_kernel(xe_ref, xn_ref, pe_ref, pt_ref, oe_ref, on_ref):
    """Eval-net and target-net forwards fused into one call (DQN learn step)."""
    oe_ref[...] = _mlp(xe_ref[...], pe_ref).astype(oe_ref.dtype)
    on_ref[...] = _mlp(xn_ref[...], pt_ref).astype(on_ref.dtype)


def _pad_batch(x):
    B = x.shape[0]
    Bp = max(8, ((B + 7) // 8) * 8)
    if Bp != B:
        x = jnp.pad(x, ((0, Bp - B), (0, 0)))
    return x, Bp


def _cost(Bp, n_nets):
    flops = 2 * n_nets * Bp * (N_STATES * LANES + K2 * LANES)
    bytes_accessed = 4 * n_nets * (Bp * N_STATES + SLAB_ROWS * LANES + Bp * LANES)
    return pl.CostEstimate(flops=flops, transcendentals=0,
                           bytes_accessed=bytes_accessed)


@jax.jit
def net_forward(x, params_slab):
    """x: [B, N_STATES]; params_slab: [SLAB_ROWS, LANES] (see layout above).

    Single pallas_call, no grid: the whole <50 KiB working set sits in VMEM,
    so no pipelining machinery is generated. (The earlier v7x block_b=B//2
    two-core split was removed per review: it duplicates the slab DMA and the
    pipeline prologue for zero compute saved.)
    """
    B = x.shape[0]
    x, Bp = _pad_batch(x)
    out = pl.pallas_call(
        _net_kernel,
        out_shape=jax.ShapeDtypeStruct((Bp, LANES), jnp.float32),
        cost_estimate=_cost(Bp, 1),
    )(x, params_slab)
    # Wrapper-side slice back to the real action count (lane-dense store in
    # the kernel, layout plumbing out here -- fused by jit into this program).
    return out[:B, :N_ACTIONS]


@jax.jit
def dqn_pair_forward(x_eval, x_next, slab_eval, slab_target):
    """Fused eval-net(b_s) and target-net(b_s_) forwards in ONE pallas_call.

    Returns (q_eval, q_next), each [B, N_ACTIONS]. This is the main
    fixed-overhead win for the DQN learn step.
    """
    # TODO(synk): the q_eval gather / TD-target max+discount math could also be
    # folded into the kernel body; kept outside to preserve the module's
    # forward-pass contract.
    B = x_eval.shape[0]
    x_eval, Bp = _pad_batch(x_eval)
    x_next, _ = _pad_batch(x_next)
    q_eval, q_next = pl.pallas_call(
        _dqn_pair_kernel,
        out_shape=(jax.ShapeDtypeStruct((Bp, LANES), jnp.float32),
                   jax.ShapeDtypeStruct((Bp, LANES), jnp.float32)),
        cost_estimate=_cost(Bp, 2),
    )(x_eval, x_next, slab_eval, slab_target)
    return q_eval[:B, :N_ACTIONS], q_next[:B, :N_ACTIONS]


def pack_params(w1, b1, w2, b2):
    """Pack (w1[N_STATES,HIDDEN], b1[HIDDEN], w2[HIDDEN,N_ACTIONS], b2[N_ACTIONS])
    into the single f32[SLAB_ROWS, LANES] slab consumed by the kernels."""
    slab = jnp.zeros((SLAB_ROWS, LANES), jnp.float32)
    slab = slab.at[0:N_STATES, 0:HIDDEN].set(w1)
    slab = slab.at[B1_ROW, 0:HIDDEN].set(b1)
    slab = slab.at[B2_ROW, 0:N_ACTIONS].set(b2)
    slab = slab.at[W2_ROW_OFF:W2_ROW_OFF + HIDDEN, 0:N_ACTIONS].set(w2)
    return slab


def init_params(key):
    """Deterministic init mimicking nn.Linear's uniform(-1/sqrt(fan_in), +).
    Weights are stored already transposed to [in, out] for the kernel."""
    k1, k2, k3, k4 = jax.random.split(key, 4)
    bound1 = 1.0 / jnp.sqrt(jnp.float32(N_STATES))
    bound2 = 1.0 / jnp.sqrt(jnp.float32(HIDDEN))
    w1 = jax.random.uniform(k1, (N_STATES, HIDDEN), jnp.float32,
                            minval=-bound1, maxval=bound1)
    b1 = jax.random.uniform(k2, (HIDDEN,), jnp.float32,
                            minval=-bound1, maxval=bound1)
    w2 = jax.random.uniform(k3, (HIDDEN, N_ACTIONS), jnp.float32,
                            minval=-bound2, maxval=bound2)
    b2 = jax.random.uniform(k4, (N_ACTIONS,), jnp.float32,
                            minval=-bound2, maxval=bound2)
    return w1, b1, w2, b2


def _ref_forward(x, w1, b1, w2, b2):
    return jnp.maximum(x @ w1 + b1, 0.0) @ w2 + b2


if __name__ == "__main__":
    key = jax.random.PRNGKey(0)
    kx, kxn, kp_eval, kp_tgt = jax.random.split(key, 4)
    x = jax.random.normal(kx, (BATCH, N_STATES), jnp.float32)        # b_s
    x_next = jax.random.normal(kxn, (BATCH, N_STATES), jnp.float32)  # b_s_

    pe = init_params(kp_eval)
    pt = init_params(kp_tgt)
    slab_eval = pack_params(*pe)
    slab_target = pack_params(*pt)

    # Single-net forward (the `Net.forward` of the spec).
    actions_value = net_forward(x, slab_eval)
    jax.block_until_ready(actions_value)
    ref_eval = _ref_forward(x, *pe)
    assert actions_value.shape == (BATCH, N_ACTIONS)
    assert jnp.allclose(actions_value, ref_eval, atol=1e-5, rtol=1e-5)

    # Fused eval + target forwards (one pallas_call for the DQN learn step).
    q_eval, q_next = dqn_pair_forward(x, x_next, slab_eval, slab_target)
    jax.block_until_ready((q_eval, q_next))
    ref_next = _ref_forward(x_next, *pt)
    assert q_eval.shape == (BATCH, N_ACTIONS) and q_next.shape == (BATCH, N_ACTIONS)
    assert jnp.allclose(q_eval, ref_eval, atol=1e-5, rtol=1e-5)
    assert jnp.allclose(q_next, ref_next, atol=1e-5, rtol=1e-5)

    print("KERNEL_OK")
</pallas_src>

<mosaic_0001>
module attributes {stable_mosaic.version = 11 : i64} {
  func.func @_net_kernel(%arg0: memref<32x4xf32, #tpu.memory_space<vmem>>, %arg1: memref<24x128xf32, #tpu.memory_space<vmem>>, %arg2: memref<32x128xf32, #tpu.memory_space<vmem>>) attributes {dimension_semantics = [], scalar_prefetch = 0 : i64, scratch_operands = 0 : i64, tpu.core_type = #tpu.core_type<tc>} {
    %c0 = arith.constant 0 : index
    %c0_0 = arith.constant 0 : index
    %0 = vector.load %arg0[%c0, %c0_0] : memref<32x4xf32, #tpu.memory_space<vmem>>, vector<32x4xf32>
    %c0_1 = arith.constant 0 : index
    %c0_2 = arith.constant 0 : index
    %1 = vector.load %arg1[%c0_1, %c0_2] : memref<24x128xf32, #tpu.memory_space<vmem>>, vector<4x128xf32>
    %c4 = arith.constant 4 : index
    %c0_3 = arith.constant 0 : index
    %2 = vector.load %arg1[%c4, %c0_3] : memref<24x128xf32, #tpu.memory_space<vmem>>, vector<1x128xf32>
    %c5 = arith.constant 5 : index
    %c0_4 = arith.constant 0 : index
    %3 = vector.load %arg1[%c5, %c0_4] : memref<24x128xf32, #tpu.memory_space<vmem>>, vector<1x128xf32>
    %c8 = arith.constant 8 : index
    %c0_5 = arith.constant 0 : index
    %4 = vector.load %arg1[%c8, %c0_5] : memref<24x128xf32, #tpu.memory_space<vmem>>, vector<16x128xf32>
    %cst = arith.constant dense<0.000000e+00> : vector<32x128xf32>
    %5 = tpu.matmul %0, %1, %cst {dimension_numbers = #tpu.dot_dimension_numbers<[1], [0], [0], [1], [0, 0, 1, 1], [], []>} : vector<32x4xf32>, vector<4x128xf32>, vector<32x128xf32> -> vector<32x128xf32>
    %6 = vector.broadcast %2 : vector<1x128xf32> to vector<32x128xf32>
    %7 = arith.addf %5, %6 : vector<32x128xf32>
    %cst_6 = arith.constant 0.000000e+00 : f32
    %8 = vector.broadcast %cst_6 : f32 to vector<32x128xf32>
    %9 = arith.maximumf %7, %8 : vector<32x128xf32>
    %10 = vector.extract_strided_slice %9 {offsets = [0, 0], sizes = [32, 16], strides = [1, 1]} : vector<32x128xf32> to vector<32x16xf32>
    %cst_7 = arith.constant dense<0.000000e+00> : vector<32x128xf32>
    %11 = tpu.matmul %10, %4, %cst_7 {dimension_numbers = #tpu.dot_dimension_numbers<[1], [0], [0], [1], [0, 0, 1, 1], [], []>} : vector<32x16xf32>, vector<16x128xf32>, vector<32x128xf32> -> vector<32x128xf32>
    %12 = vector.broadcast %3 : vector<1x128xf32> to vector<32x128xf32>
    %13 = arith.addf %11, %12 : vector<32x128xf32>
    %c0_8 = arith.constant 0 : index
    %c0_9 = arith.constant 0 : index
    %14 = vector.load %arg2[%c0_8, %c0_9] : memref<32x128xf32, #tpu.memory_space<vmem>>, vector<32x128xf32>
    tpu.vector_store %arg2[%c0_8, %c0_9], %13 {strides = array<i32>} : memref<32x128xf32, #tpu.memory_space<vmem>>, vector<32x128xf32>,
    return
  }
}

</mosaic_0001>

<llo_original>
// kernel: net_forward.1
$region0: #{net_forward.1}
  #allocation0 [shape = 'u32[]', space=smem, size = 0x4, offset = 0x4, fixed_abs, tag = 'smem constant byte address 0x4 - core index']
  #allocation1 [shape = 'u32[144,128]{1,0:T(1,128)}', space=vmem, size = 0x12000, scoped, tag = 'internal scratch']
  %s0 = inlined_call_operand.vmem [shape: f32[32,4], index: 0, kind: input, shape index: {}]
  %s1 = inlined_call_operand.vmem [shape: f32[24,128], index: 1, kind: input, shape index: {}]
  %s2 = inlined_call_operand.vmem [shape: f32[32,128], index: 2, kind: output, shape index: {}]
  %s3 = sld [smem:[#allocation0]]
  $region18: #{net_forward.1} parent=0
    _
  %s5 = ssub.s32 1, %s3
  %s6 = scalar_select 0, %s5, %s3
  // Predicated region
  $region2: #{net_forward.1} parent=0 // pred_check
    _
  $region3: #{net_forward.1} parent=0 // pred_check_branch
    %8 = sbr.rel (0) target = $region5
  $region4: #{net_forward.1} parent=0 // pred_region
    _
  $region5: #{net_forward.1} parent=0 // pred_fallthru
    _
  // Predicated region
  $region6: #{net_forward.1} parent=0 // pred_check
    _
  $region7: #{net_forward.1} parent=0 // pred_check_branch
    %10 = sbr.rel (0) target = $region9
  $region8: #{net_forward.1} parent=0 // pred_region
    _
  $region9: #{net_forward.1} parent=0 // pred_fallthru
    _
  %v11 = vld [vmem:[%s0] sm:$0xff]
  %v12 = vld [vmem:[%s0 + $0x8] sm:$0xff]
  %v13 = vld [vmem:[%s0 + $0x10] sm:$0xff]
  %v14 = vld [vmem:[%s0 + $0x18] sm:$0xff]
  %v15 = vld [vmem:[%s1] sm:$0xf]
  %v16 = vld [vmem:[%s1 + $0x4] sm:$0x1]
  %v17 = vld [vmem:[%s1 + $0x5] sm:$0x1]
  %v18 = vld [vmem:[%s1 + $0x8] sm:$0xff]
  %v19 = vld [vmem:[%s1 + $0x10] sm:$0xff]
  %v20 = vlaneseq
  %v21 = vshrl.u32 %v20, 7
  %v22 = vsub.s32 0, %v21
  %v23 = vrot.slane %v16, %v22
  %vm24 = vcmask 31744
  %v26 = vsel %vm24, %v11, 0
  %v29 = vsel %vm24, %v12, 0
  %v32 = vsel %vm24, %v13, 0
  %v35 = vsel %vm24, %v14, 0
  %vm37 = vcmask 1043456
  %v39 = vsel %vm37, %v15, 0
  %41 = vmatprep.subr.mxu0 0.0
  %42 = vmatpush1.msra.mxu0 0.0
  %43 = vmatprep.subr.mxu0 0.0
  %44 = vmatpush1.msra.mxu0 0.0
  %45 = vmatprep.subr.mxu0 0.0
  %46 = vmatpush1.msra.mxu0 0.0
  %47 = vmatprep.subr.mxu0 0.0
  %48 = vmatpush1.msra.mxu0 0.0
  %49 = vmatprep.subr.mxu0 0.0
  %50 = vmatpush1.msra.mxu0 0.0
  %51 = vmatprep.subr.mxu0 0.0
  %52 = vmatpush1.msra.mxu0 0.0
  %53 = vmatprep.subr.mxu0 0.0
  %54 = vmatpush1.msra.mxu0 0.0
  %55 = vmatprep.subr.mxu0 0.0
  %56 = vmatpush1.msra.mxu0 0.0
  %57 = vmatprep.subr.mxu0 0.0
  %58 = vmatpush1.msra.mxu0 0.0
  %59 = vmatprep.subr.mxu0 0.0
  %60 = vmatpush1.msra.mxu0 0.0
  %61 = vmatprep.subr.mxu0 0.0
  %62 = vmatpush1.msra.mxu0 0.0
  %63 = vmatprep.subr.mxu0 0.0
  %64 = vmatpush1.msra.mxu0 0.0
  %65 = vmatprep.subr.mxu0 0.0
  %66 = vmatpush1.msra.mxu0 0.0
  %67 = vmatprep.subr.mxu0 0.0
  %68 = vmatpush1.msra.mxu0 0.0
  %69 = vmatprep.subr.mxu0 0.0
  %70 = vmatpush1.msra.mxu0 0.0
  %71 = vmatprep.subr.mxu0 0.0
  %72 = vmatpush1.msra.mxu0 %v39
  %73 = vmatprep.subr.mxu0 0.0
  %74 = vmatpush2.msra.mxu0 0.0
  %75 = vmatprep.subr.mxu0 0.0
  %76 = vmatpush2.msra.mxu0 0.0
  %77 = vmatprep.subr.mxu0 0.0
  %78 = vmatpush2.msra.mxu0 0.0
  %79 = vmatprep.subr.mxu0 0.0
  %80 = vmatpush2.msra.mxu0 0.0
  %81 = vmatprep.subr.mxu0 0.0
  %82 = vmatpush2.msra.mxu0 0.0
  %83 = vmatprep.subr.mxu0 0.0
  %84 = vmatpush2.msra.mxu0 0.0
  %85 = vmatprep.subr.mxu0 0.0
  %86 = vmatpush2.msra.mxu0 0.0
  %87 = vmatprep.subr.mxu0 0.0
  %88 = vmatpush2.msra.mxu0 0.0
  %89 = vmatprep.subr.mxu0 0.0
  %90 = vmatpush2.msra.mxu0 0.0
  %91 = vmatprep.subr.mxu0 0.0
  %92 = vmatpush2.msra.mxu0 0.0
  %93 = vmatprep.subr.mxu0 0.0
  %94 = vmatpush2.msra.mxu0 0.0
  %95 = vmatprep.subr.mxu0 0.0
  %96 = vmatpush2.msra.mxu0 0.0
  %97 = vmatprep.subr.mxu0 0.0
  %98 = vmatpush2.msra.mxu0 0.0
  %99 = vmatprep.subr.mxu0 0.0
  %100 = vmatpush2.msra.mxu0 0.0
  %101 = vmatprep.subr.mxu0 0.0
  %102 = vmatpush2.msra.mxu0 0.0
  %103 = vmatprep.subr.mxu0 0.0
  %104 = vmatpush2.msra.mxu0 0.0
  %105 = vmatprep.mubr.f32.mxu0 0.0
  %106 = vmatmul.mubr.f32.gmra.mxu0 %v26
  %v107 = vpop.f32.mrf.mxu0
  %v108 = vadd.f32 %v23, %v107
  %v109 = vpop.f32.mrf.mxu0
  %110 = vmatprep.mubr.f32.mxu0 0.0
  %111 = vmatmul.mubr.f32.gmra.mxu0 %v29
  %v112 = vpop.f32.mrf.mxu0
  %v113 = vadd.f32 %v23, %v112
  %v114 = vpop.f32.mrf.mxu0
  %115 = vmatprep.mubr.f32.mxu0 0.0
  %116 = vmatmul.mubr.f32.gmra.mxu0 %v32
  %v117 = vpop.f32.mrf.mxu0
  %v118 = vadd.f32 %v23, %v117
  %v119 = vpop.f32.mrf.mxu0
  %120 = vmatprep.mubr.f32.mxu0 0.0
  %121 = vmatmul.mubr.f32.gmra.mxu0 %v35
  %v122 = vpop.f32.mrf.mxu0
  %v123 = vadd.f32 %v23, %v122
  %v124 = vpop.f32.mrf.mxu0
  %125 = vdwg.mxu0
  %v126 = vmax.f32 %v108, 0.0
  %v127 = vmax.f32 %v113, 0.0
  %v128 = vmax.f32 %v118, 0.0
  %v129 = vmax.f32 %v123, 0.0
  %v130 = vlaneseq
  %v131 = vshrl.u32 %v130, 7
  %v132 = vsub.s32 0, %v131
  %v133 = vrot.slane %v17, %v132
  %vm134 = vcmask 130048
  %v136 = vsel %vm134, %v126, 0
  %v139 = vsel %vm134, %v127, 0
  %v142 = vsel %vm134, %v128, 0
  %v145 = vsel %vm134, %v129, 0
  %147 = vmatprep.subr.mxu0 0.0
  %148 = vmatpush1.msra.mxu0 0.0
  %149 = vmatprep.subr.mxu0 0.0
  %150 = vmatpush1.msra.mxu0 0.0
  %151 = vmatprep.subr.mxu0 0.0
  %152 = vmatpush1.msra.mxu0 0.0
  %153 = vmatprep.subr.mxu0 0.0
  %154 = vmatpush1.msra.mxu0 0.0
  %155 = vmatprep.subr.mxu0 0.0
  %156 = vmatpush1.msra.mxu0 0.0
  %157 = vmatprep.subr.mxu0 0.0
  %158 = vmatpush1.msra.mxu0 0.0
  %159 = vmatprep.subr.mxu0 0.0
  %160 = vmatpush1.msra.mxu0 0.0
  %161 = vmatprep.subr.mxu0 0.0
  %162 = vmatpush1.msra.mxu0 0.0
  %163 = vmatprep.subr.mxu0 0.0
  %164 = vmatpush1.msra.mxu0 0.0
  %165 = vmatprep.subr.mxu0 0.0
  %166 = vmatpush1.msra.mxu0 0.0
  %167 = vmatprep.subr.mxu0 0.0
  %168 = vmatpush1.msra.mxu0 0.0
  %169 = vmatprep.subr.mxu0 0.0
  %170 = vmatpush1.msra.mxu0 0.0
  %171 = vmatprep.subr.mxu0 0.0
  %172 = vmatpush1.msra.mxu0 0.0
  %173 = vmatprep.subr.mxu0 0.0
  %174 = vmatpush1.msra.mxu0 0.0
  %175 = vmatprep.subr.mxu0 0.0
  %176 = vmatpush1.msra.mxu0 %v19
  %177 = vmatprep.subr.mxu0 0.0
  %178 = vmatpush1.msra.mxu0 %v18
  %179 = vmatprep.subr.mxu0 0.0
  %180 = vmatpush2.msra.mxu0 0.0
  %181 = vmatprep.subr.mxu0 0.0
  %182 = vmatpush2.msra.mxu0 0.0
  %183 = vmatprep.subr.mxu0 0.0
  %184 = vmatpush2.msra.mxu0 0.0
  %185 = vmatprep.subr.mxu0 0.0
  %186 = vmatpush2.msra.mxu0 0.0
  %187 = vmatprep.subr.mxu0 0.0
  %188 = vmatpush2.msra.mxu0 0.0
  %189 = vmatprep.subr.mxu0 0.0
  %190 = vmatpush2.msra.mxu0 0.0
  %191 = vmatprep.subr.mxu0 0.0
  %192 = vmatpush2.msra.mxu0 0.0
  %193 = vmatprep.subr.mxu0 0.0
  %194 = vmatpush2.msra.mxu0 0.0
  %195 = vmatprep.subr.mxu0 0.0
  %196 = vmatpush2.msra.mxu0 0.0
  %197 = vmatprep.subr.mxu0 0.0
  %198 = vmatpush2.msra.mxu0 0.0
  %199 = vmatprep.subr.mxu0 0.0
  %200 = vmatpush2.msra.mxu0 0.0
  %201 = vmatprep.subr.mxu0 0.0
  %202 = vmatpush2.msra.mxu0 0.0
  %203 = vmatprep.subr.mxu0 0.0
  %204 = vmatpush2.msra.mxu0 0.0
  %205 = vmatprep.subr.mxu0 0.0
  %206 = vmatpush2.msra.mxu0 0.0
  %207 = vmatprep.subr.mxu0 0.0
  %208 = vmatpush2.msra.mxu0 0.0
  %209 = vmatprep.subr.mxu0 0.0
  %210 = vmatpush2.msra.mxu0 0.0
  %211 = vmatprep.mubr.f32.mxu0 0.0
  %212 = vmatmul.mubr.f32.gmra.mxu0 %v136
  %v213 = vpop.f32.mrf.mxu0
  %v214 = vadd.f32 %v133, %v213
  %v215 = vpop.f32.mrf.mxu0
  %216 = vmatprep.mubr.f32.mxu0 0.0
  %217 = vmatmul.mubr.f32.gmra.mxu0 %v139
  %v218 = vpop.f32.mrf.mxu0
  %v219 = vadd.f32 %v133, %v218
  %v220 = vpop.f32.mrf.mxu0
  %221 = vmatprep.mubr.f32.mxu0 0.0
  %222 = vmatmul.mubr.f32.gmra.mxu0 %v142
  %v223 = vpop.f32.mrf.mxu0
  %v224 = vadd.f32 %v133, %v223
  %v225 = vpop.f32.mrf.mxu0
  %226 = vmatprep.mubr.f32.mxu0 0.0
  %227 = vmatmul.mubr.f32.gmra.mxu0 %v145
  %v228 = vpop.f32.mrf.mxu0
  %v229 = vadd.f32 %v133, %v228
  %v230 = vpop.f32.mrf.mxu0
  %231 = vdwg.mxu0
  %232 = vst [vmem:[%s2] sm:$0xff] %v214
  %233 = vst [vmem:[%s2 + $0x8] sm:$0xff] %v219
  %234 = vst [vmem:[%s2 + $0x10] sm:$0xff] %v224
  %235 = vst [vmem:[%s2 + $0x18] sm:$0xff] %v229
  // Predicated region
  $region10: #{net_forward.1} parent=0 // pred_check
    _
  $region11: #{net_forward.1} parent=0 // pred_check_branch
    %237 = sbr.rel (0) target = $region13
  $region12: #{net_forward.1} parent=0 // pred_region
    _
  $region13: #{net_forward.1} parent=0 // pred_fallthru
    _
  // Predicated region
  $region14: #{net_forward.1} parent=0 // pred_check
    _
  $region15: #{net_forward.1} parent=0 // pred_check_branch
    %239 = sbr.rel (0) target = $region17
  $region16: #{net_forward.1} parent=0 // pred_region
    _
  $region17: #{net_forward.1} parent=0 // pred_fallthru
    _

</llo_original>
